<compile_context>
chip_gen: v6e
topology: v6e:2x2x1
jax: 0.10.0
libtpu: 0.0.40
codegen_flags: <defaults>
</compile_context>

<pallas_src>
import functools

import numpy as np
import jax
import jax.numpy as jnp
from jax import lax
from jax.experimental import pallas as pl
from jax.experimental.pallas import tpu as pltpu

EPS = 1e-5          # torch.nn.BatchNorm2d default
NEG_SLOPE = 0.01    # torch.nn.LeakyReLU default


# --------------------------------- kernel -----------------------------------

def resblock_kernel(x_ref, masks_ref, w1_ref, g1_ref, b1_ref,
                    w2_ref, g2_ref, b2_ref, comb_ref, out_ref,
                    *, img_w, inv_count):
    NC, L = x_ref.shape                       # rows = (n, c), lanes = (h, w)
    x = x_ref[...]
    comb = comb_ref[...]                      # (NC, NC) cross-sample combine
    ones_col = jnp.ones((L, 1), jnp.float32)  # hoisted; reused by 4 reductions

    # Tap order k = (dy+1)*3 + (dx+1); must match the wrapper's mask / weight
    # layout (same dy/dx loop order).
    shifts = [dy * img_w + dx for dy in (-1, 0, 1) for dx in (-1, 0, 1)]
    # Hoist the 9 combined border masks once; reused by both convs.
    mask_rows = [masks_ref[pl.ds(k, 1), :] for k in range(9)]   # each (1, L)

    def conv3x3(a, wbig):
        # a: (NC, L).  One im2col matmul per conv; each tap is a full
        # sublane-tile-aligned (NC, L) block (no repack on the concat).
        taps = []
        for k, s in enumerate(shifts):
            t = a if s == 0 else pltpu.roll(a, shift=(-s) % L, axis=1)
            taps.append(t if s == 0 else t * mask_rows[k])
        xcol = jnp.concatenate(taps, axis=0)                    # (9*NC, L)
        return jnp.dot(wbig, xcol, preferred_element_type=jnp.float32)

    def chan_sums(t):
        # Per-channel totals (replicated over samples) via the idle MXU:
        # lane reduction against ones, then the tiny cross-sample combine.
        row = jnp.dot(t, ones_col, preferred_element_type=jnp.float32)   # (NC,1)
        return jnp.dot(comb, row, preferred_element_type=jnp.float32)    # (NC,1)

    def bn_lrelu(h, gamma, beta):
        # Training-mode BatchNorm over (N, H, W) per channel, biased variance.
        mean = chan_sums(h) * inv_count
        d = h - mean                                   # reused: var + norm
        var = chan_sums(d * d) * inv_count
        y = d * lax.rsqrt(var + EPS) * gamma + beta
        return jnp.where(y > 0, y, NEG_SLOPE * y)

    h1 = bn_lrelu(conv3x3(x, w1_ref[...]), g1_ref[...], b1_ref[...])
    h2 = bn_lrelu(conv3x3(h1, w2_ref[...]), g2_ref[...], b2_ref[...])

    out_ref[...] = x + h2                              # residual, lane-dense store


# ------------------------------ JAX wrapper ----------------------------------

def _convtranspose_weight_to_conv(w_t):
    """ConvTranspose2d weight (Cin, Cout, 3, 3) -> equivalent HWIO conv weight
    (3, 3, Cin, Cout): flip spatially, swap channel axes."""
    return jnp.transpose(w_t[:, :, ::-1, ::-1], (2, 3, 0, 1))


def _convt_to_wmat(w_t):
    """(Cin, Cout, 3, 3) -> (Cout, 9*Cin) im2col weight matrix."""
    w_conv = _convtranspose_weight_to_conv(w_t)
    kh, kw, cin, cout = w_conv.shape
    return jnp.transpose(w_conv.reshape(kh * kw * cin, cout), (1, 0))


def _wmat_to_blockdiag(wmat, n, cin, cout):
    """(Cout, 9*Cin) -> (N*Cout, 9*N*Cin), block-diagonal over the sample axis.
    Row n*Cout+co, column k*(N*Cin) + n'*Cin + ci is nonzero only for n == n'."""
    w3 = wmat.reshape(cout, 9, cin)
    eye = jnp.eye(n, dtype=wmat.dtype)
    big = jnp.einsum('okc,nm->nokmc', w3, eye)          # (N, Cout, 9, N, Cin)
    return big.reshape(n * cout, 9 * n * cin)


def _build_masks(h, w):
    """9 combined border masks (k = (dy+1)*3+(dx+1)) evaluated at output
    coordinates, so the circular lane roll never leaks across image borders."""
    pos = np.arange(h * w)
    yy, xx = pos // w, pos % w
    rows = []
    for dy in (-1, 0, 1):
        for dx in (-1, 0, 1):
            m = (yy + dy >= 0) & (yy + dy < h) & (xx + dx >= 0) & (xx + dx < w)
            rows.append(m.astype(np.float32))
    return np.stack(rows, axis=0)                        # (9, H*W)


def resblock_transpose(x_nchw, params):
    w1_t, g1, b1, w2_t, g2, b2 = params
    N, C, H, W = x_nchw.shape
    L = H * W
    NC = N * C

    # Free row-major view: rows = (n, c), lanes = (h, w).  No HBM transpose.
    x2d = x_nchw.reshape(NC, L).astype(jnp.float32)

    w1b = _wmat_to_blockdiag(_convt_to_wmat(w1_t), N, C, C).astype(jnp.float32)
    w2b = _wmat_to_blockdiag(_convt_to_wmat(w2_t), N, C, C).astype(jnp.float32)
    masks = jnp.asarray(_build_masks(H, W))
    comb = jnp.asarray(np.kron(np.ones((N, N)), np.eye(C)).astype(np.float32))

    def per_row(p):   # (C,) -> (N*C, 1), row n*C+c = p[c]
        return jnp.tile(p.astype(jnp.float32).reshape(1, C), (N, 1)).reshape(NC, 1)

    vmem = pl.BlockSpec(memory_space=pltpu.MemorySpace.VMEM)
    flops = 2 * (2 * NC * (9 * NC) * L) + 4 * (2 * NC * L)
    bytes_accessed = (2 * NC * L + 9 * L + 2 * NC * 9 * NC + NC * NC + 4 * NC) * 4

    out2d = pl.pallas_call(
        functools.partial(resblock_kernel, img_w=W, inv_count=1.0 / (N * L)),
        out_shape=jax.ShapeDtypeStruct((NC, L), jnp.float32),
        in_specs=[vmem] * 9,
        out_specs=vmem,
        input_output_aliases={0: 0},          # reuse the residual input buffer
        cost_estimate=pl.CostEstimate(flops=flops, transcendentals=2 * NC,
                                      bytes_accessed=bytes_accessed),
    )(x2d, masks, w1b, per_row(g1), per_row(b1), w2b, per_row(g2), per_row(b2), comb)

    return out2d.reshape(N, C, H, W)                     # free reshape back to NCHW


# ------------------------- pure-JAX reference (check) ------------------------

def reference_nchw(x_nchw, params):
    w1_t, g1, b1, w2_t, g2, b2 = params
    x = jnp.transpose(x_nchw, (0, 2, 3, 1)).astype(jnp.float32)

    def block(h, w_t, g, b):
        w = _convtranspose_weight_to_conv(w_t)
        y = lax.conv_general_dilated(
            h, w, (1, 1), 'SAME',
            dimension_numbers=('NHWC', 'HWIO', 'NHWC'),
            precision=lax.Precision.HIGHEST)
        m = jnp.mean(y, axis=(0, 1, 2), keepdims=True)
        v = jnp.mean((y - m) ** 2, axis=(0, 1, 2), keepdims=True)
        y = (y - m) * lax.rsqrt(v + EPS) * g.reshape(1, 1, 1, -1) \
            + b.reshape(1, 1, 1, -1)
        return jnp.where(y > 0, y, NEG_SLOPE * y)

    h = block(x, w1_t, g1, b1)
    h = block(h, w2_t, g2, b2)
    return jnp.transpose(x + h, (0, 3, 1, 2))


# ----------------------------------- main ------------------------------------

if __name__ == "__main__":
    N, C, H, W = 2, 4, 16, 16          # in_channels == out_channels (residual)

    key = jax.random.PRNGKey(0)
    kx, kw1, kw2, kg1, kb1, kg2, kb2 = jax.random.split(key, 7)

    x = jax.random.normal(kx, (N, C, H, W), jnp.float32)
    # ConvTranspose2d weights: (in_channels, out_channels, 3, 3)
    w1_t = 0.2 * jax.random.normal(kw1, (C, C, 3, 3), jnp.float32)
    w2_t = 0.2 * jax.random.normal(kw2, (C, C, 3, 3), jnp.float32)
    # BatchNorm affine params (deterministic, non-trivial)
    g1 = 1.0 + 0.1 * jax.random.normal(kg1, (C,), jnp.float32)
    b1 = 0.1 * jax.random.normal(kb1, (C,), jnp.float32)
    g2 = 1.0 + 0.1 * jax.random.normal(kg2, (C,), jnp.float32)
    b2 = 0.1 * jax.random.normal(kb2, (C,), jnp.float32)

    params = (w1_t, g1, b1, w2_t, g2, b2)

    # Reference first (so the aliased-output kernel can never perturb the check).
    ref = jax.block_until_ready(reference_nchw(x, params))

    out = resblock_transpose(x, params)
    out = jax.block_until_ready(out)

    assert out.shape == (N, C, H, W)
    assert jnp.allclose(out, ref, atol=2e-2, rtol=2e-2), \
        f"max abs err {jnp.max(jnp.abs(out - ref))}"

    print("KERNEL_OK")
</pallas_src>

<mosaic_0001>
module attributes {stable_mosaic.version = 11 : i64} {
  func.func @resblock_kernel(%arg0: memref<8x256xf32, #tpu.memory_space<vmem>>, %arg1: memref<9x256xf32, #tpu.memory_space<vmem>>, %arg2: memref<8x72xf32, #tpu.memory_space<vmem>>, %arg3: memref<8x1xf32, #tpu.memory_space<vmem>>, %arg4: memref<8x1xf32, #tpu.memory_space<vmem>>, %arg5: memref<8x72xf32, #tpu.memory_space<vmem>>, %arg6: memref<8x1xf32, #tpu.memory_space<vmem>>, %arg7: memref<8x1xf32, #tpu.memory_space<vmem>>, %arg8: memref<8x8xf32, #tpu.memory_space<vmem>>, %arg9: memref<8x256xf32, #tpu.memory_space<vmem>>) attributes {dimension_semantics = [], scalar_prefetch = 0 : i64, scratch_operands = 0 : i64, tpu.core_type = #tpu.core_type<tc>} {
    %c0 = arith.constant 0 : index
    %c0_0 = arith.constant 0 : index
    %0 = vector.load %arg0[%c0, %c0_0] : memref<8x256xf32, #tpu.memory_space<vmem>>, vector<8x256xf32>
    %c0_1 = arith.constant 0 : index
    %c0_2 = arith.constant 0 : index
    %1 = vector.load %arg8[%c0_1, %c0_2] : memref<8x8xf32, #tpu.memory_space<vmem>>, vector<8x8xf32>
    %cst = arith.constant 1.000000e+00 : f32
    %2 = vector.broadcast %cst : f32 to vector<256x1xf32>
    %c0_3 = arith.constant 0 : index
    %c0_4 = arith.constant 0 : index
    %3 = vector.load %arg1[%c0_3, %c0_4] : memref<9x256xf32, #tpu.memory_space<vmem>>, vector<1x256xf32>
    %c1 = arith.constant 1 : index
    %c0_5 = arith.constant 0 : index
    %4 = vector.load %arg1[%c1, %c0_5] : memref<9x256xf32, #tpu.memory_space<vmem>>, vector<1x256xf32>
    %c2 = arith.constant 2 : index
    %c0_6 = arith.constant 0 : index
    %5 = vector.load %arg1[%c2, %c0_6] : memref<9x256xf32, #tpu.memory_space<vmem>>, vector<1x256xf32>
    %c3 = arith.constant 3 : index
    %c0_7 = arith.constant 0 : index
    %6 = vector.load %arg1[%c3, %c0_7] : memref<9x256xf32, #tpu.memory_space<vmem>>, vector<1x256xf32>
    %c5 = arith.constant 5 : index
    %c0_8 = arith.constant 0 : index
    %7 = vector.load %arg1[%c5, %c0_8] : memref<9x256xf32, #tpu.memory_space<vmem>>, vector<1x256xf32>
    %c6 = arith.constant 6 : index
    %c0_9 = arith.constant 0 : index
    %8 = vector.load %arg1[%c6, %c0_9] : memref<9x256xf32, #tpu.memory_space<vmem>>, vector<1x256xf32>
    %c7 = arith.constant 7 : index
    %c0_10 = arith.constant 0 : index
    %9 = vector.load %arg1[%c7, %c0_10] : memref<9x256xf32, #tpu.memory_space<vmem>>, vector<1x256xf32>
    %c8 = arith.constant 8 : index
    %c0_11 = arith.constant 0 : index
    %10 = vector.load %arg1[%c8, %c0_11] : memref<9x256xf32, #tpu.memory_space<vmem>>, vector<1x256xf32>
    %c0_12 = arith.constant 0 : index
    %c0_13 = arith.constant 0 : index
    %11 = vector.load %arg2[%c0_12, %c0_13] : memref<8x72xf32, #tpu.memory_space<vmem>>, vector<8x72xf32>
    %c17_i32 = arith.constant 17 : i32
    %12 = tpu.dynamic_rotate %0 by %c17_i32 dim 1 : vector<8x256xf32>, i32 -> vector<8x256xf32>
    %13 = vector.broadcast %3 : vector<1x256xf32> to vector<8x256xf32>
    %14 = arith.mulf %12, %13 : vector<8x256xf32>
    %c16_i32 = arith.constant 16 : i32
    %15 = tpu.dynamic_rotate %0 by %c16_i32 dim 1 : vector<8x256xf32>, i32 -> vector<8x256xf32>
    %16 = vector.broadcast %4 : vector<1x256xf32> to vector<8x256xf32>
    %17 = arith.mulf %15, %16 : vector<8x256xf32>
    %c15_i32 = arith.constant 15 : i32
    %18 = tpu.dynamic_rotate %0 by %c15_i32 dim 1 : vector<8x256xf32>, i32 -> vector<8x256xf32>
    %19 = vector.broadcast %5 : vector<1x256xf32> to vector<8x256xf32>
    %20 = arith.mulf %18, %19 : vector<8x256xf32>
    %c1_i32 = arith.constant 1 : i32
    %21 = tpu.dynamic_rotate %0 by %c1_i32 dim 1 : vector<8x256xf32>, i32 -> vector<8x256xf32>
    %22 = vector.broadcast %6 : vector<1x256xf32> to vector<8x256xf32>
    %23 = arith.mulf %21, %22 : vector<8x256xf32>
    %c255_i32 = arith.constant 255 : i32
    %24 = tpu.dynamic_rotate %0 by %c255_i32 dim 1 : vector<8x256xf32>, i32 -> vector<8x256xf32>
    %25 = vector.broadcast %7 : vector<1x256xf32> to vector<8x256xf32>
    %26 = arith.mulf %24, %25 : vector<8x256xf32>
    %c241_i32 = arith.constant 241 : i32
    %27 = tpu.dynamic_rotate %0 by %c241_i32 dim 1 : vector<8x256xf32>, i32 -> vector<8x256xf32>
    %28 = vector.broadcast %8 : vector<1x256xf32> to vector<8x256xf32>
    %29 = arith.mulf %27, %28 : vector<8x256xf32>
    %c240_i32 = arith.constant 240 : i32
    %30 = tpu.dynamic_rotate %0 by %c240_i32 dim 1 : vector<8x256xf32>, i32 -> vector<8x256xf32>
    %31 = vector.broadcast %9 : vector<1x256xf32> to vector<8x256xf32>
    %32 = arith.mulf %30, %31 : vector<8x256xf32>
    %c239_i32 = arith.constant 239 : i32
    %33 = tpu.dynamic_rotate %0 by %c239_i32 dim 1 : vector<8x256xf32>, i32 -> vector<8x256xf32>
    %34 = vector.broadcast %10 : vector<1x256xf32> to vector<8x256xf32>
    %35 = arith.mulf %33, %34 : vector<8x256xf32>
    %36 = tpu.concatenate %14, %17, %20, %23, %0, %26, %29, %32, %35 in 0 : vector<8x256xf32>, vector<8x256xf32>, vector<8x256xf32>, vector<8x256xf32>, vector<8x256xf32>, vector<8x256xf32>, vector<8x256xf32>, vector<8x256xf32>, vector<8x256xf32> -> vector<72x256xf32>
    %cst_14 = arith.constant dense<0.000000e+00> : vector<8x256xf32>
    %37 = tpu.matmul %11, %36, %cst_14 {dimension_numbers = #tpu.dot_dimension_numbers<[1], [0], [0], [1], [0, 0, 1, 1], [], []>} : vector<8x72xf32>, vector<72x256xf32>, vector<8x256xf32> -> vector<8x256xf32>
    %c0_15 = arith.constant 0 : index
    %c0_16 = arith.constant 0 : index
    %38 = vector.load %arg3[%c0_15, %c0_16] : memref<8x1xf32, #tpu.memory_space<vmem>>, vector<8x1xf32>
    %c0_17 = arith.constant 0 : index
    %c0_18 = arith.constant 0 : index
    %39 = vector.load %arg4[%c0_17, %c0_18] : memref<8x1xf32, #tpu.memory_space<vmem>>, vector<8x1xf32>
    %cst_19 = arith.constant dense<0.000000e+00> : vector<8x1xf32>
    %40 = tpu.matmul %37, %2, %cst_19 {dimension_numbers = #tpu.dot_dimension_numbers<[1], [0], [0], [1], [0, 0, 1, 1], [], []>} : vector<8x256xf32>, vector<256x1xf32>, vector<8x1xf32> -> vector<8x1xf32>
    %cst_20 = arith.constant dense<0.000000e+00> : vector<8x1xf32>
    %41 = tpu.matmul %1, %40, %cst_20 {dimension_numbers = #tpu.dot_dimension_numbers<[1], [0], [0], [1], [0, 0, 1, 1], [], []>} : vector<8x8xf32>, vector<8x1xf32>, vector<8x1xf32> -> vector<8x1xf32>
    %cst_21 = arith.constant 0.001953125 : f32
    %42 = vector.broadcast %cst_21 : f32 to vector<8x1xf32>
    %43 = arith.mulf %41, %42 : vector<8x1xf32>
    %44 = vector.broadcast %43 : vector<8x1xf32> to vector<8x256xf32>
    %45 = arith.subf %37, %44 : vector<8x256xf32>
    %46 = arith.mulf %45, %45 : vector<8x256xf32>
    %cst_22 = arith.constant dense<0.000000e+00> : vector<8x1xf32>
    %47 = tpu.matmul %46, %2, %cst_22 {dimension_numbers = #tpu.dot_dimension_numbers<[1], [0], [0], [1], [0, 0, 1, 1], [], []>} : vector<8x256xf32>, vector<256x1xf32>, vector<8x1xf32> -> vector<8x1xf32>
    %cst_23 = arith.constant dense<0.000000e+00> : vector<8x1xf32>
    %48 = tpu.matmul %1, %47, %cst_23 {dimension_numbers = #tpu.dot_dimension_numbers<[1], [0], [0], [1], [0, 0, 1, 1], [], []>} : vector<8x8xf32>, vector<8x1xf32>, vector<8x1xf32> -> vector<8x1xf32>
    %cst_24 = arith.constant 0.001953125 : f32
    %49 = vector.broadcast %cst_24 : f32 to vector<8x1xf32>
    %50 = arith.mulf %48, %49 : vector<8x1xf32>
    %cst_25 = arith.constant 9.99999974E-6 : f32
    %51 = vector.broadcast %cst_25 : f32 to vector<8x1xf32>
    %52 = arith.addf %50, %51 : vector<8x1xf32>
    %53 = math.rsqrt %52 : vector<8x1xf32>
    %54 = vector.broadcast %53 : vector<8x1xf32> to vector<8x256xf32>
    %55 = arith.mulf %45, %54 : vector<8x256xf32>
    %56 = vector.broadcast %38 : vector<8x1xf32> to vector<8x256xf32>
    %57 = arith.mulf %55, %56 : vector<8x256xf32>
    %58 = vector.broadcast %39 : vector<8x1xf32> to vector<8x256xf32>
    %59 = arith.addf %57, %58 : vector<8x256xf32>
    %cst_26 = arith.constant 0.000000e+00 : f32
    %60 = vector.broadcast %cst_26 : f32 to vector<8x256xf32>
    %61 = arith.cmpf ogt, %59, %60 : vector<8x256xf32>
    %cst_27 = arith.constant 0.00999999977 : f32
    %62 = vector.broadcast %cst_27 : f32 to vector<8x256xf32>
    %63 = arith.mulf %62, %59 : vector<8x256xf32>
    %64 = arith.select %61, %59, %63 : vector<8x256xi1>, vector<8x256xf32>
    %c0_28 = arith.constant 0 : index
    %c0_29 = arith.constant 0 : index
    %65 = vector.load %arg5[%c0_28, %c0_29] : memref<8x72xf32, #tpu.memory_space<vmem>>, vector<8x72xf32>
    %c17_i32_30 = arith.constant 17 : i32
    %66 = tpu.dynamic_rotate %64 by %c17_i32_30 dim 1 : vector<8x256xf32>, i32 -> vector<8x256xf32>
    %67 = vector.broadcast %3 : vector<1x256xf32> to vector<8x256xf32>
    %68 = arith.mulf %66, %67 : vector<8x256xf32>
    %c16_i32_31 = arith.constant 16 : i32
    %69 = tpu.dynamic_rotate %64 by %c16_i32_31 dim 1 : vector<8x256xf32>, i32 -> vector<8x256xf32>
    %70 = vector.broadcast %4 : vector<1x256xf32> to vector<8x256xf32>
    %71 = arith.mulf %69, %70 : vector<8x256xf32>
    %c15_i32_32 = arith.constant 15 : i32
    %72 = tpu.dynamic_rotate %64 by %c15_i32_32 dim 1 : vector<8x256xf32>, i32 -> vector<8x256xf32>
    %73 = vector.broadcast %5 : vector<1x256xf32> to vector<8x256xf32>
    %74 = arith.mulf %72, %73 : vector<8x256xf32>
    %c1_i32_33 = arith.constant 1 : i32
    %75 = tpu.dynamic_rotate %64 by %c1_i32_33 dim 1 : vector<8x256xf32>, i32 -> vector<8x256xf32>
    %76 = vector.broadcast %6 : vector<1x256xf32> to vector<8x256xf32>
    %77 = arith.mulf %75, %76 : vector<8x256xf32>
    %c255_i32_34 = arith.constant 255 : i32
    %78 = tpu.dynamic_rotate %64 by %c255_i32_34 dim 1 : vector<8x256xf32>, i32 -> vector<8x256xf32>
    %79 = vector.broadcast %7 : vector<1x256xf32> to vector<8x256xf32>
    %80 = arith.mulf %78, %79 : vector<8x256xf32>
    %c241_i32_35 = arith.constant 241 : i32
    %81 = tpu.dynamic_rotate %64 by %c241_i32_35 dim 1 : vector<8x256xf32>, i32 -> vector<8x256xf32>
    %82 = vector.broadcast %8 : vector<1x256xf32> to vector<8x256xf32>
    %83 = arith.mulf %81, %82 : vector<8x256xf32>
    %c240_i32_36 = arith.constant 240 : i32
    %84 = tpu.dynamic_rotate %64 by %c240_i32_36 dim 1 : vector<8x256xf32>, i32 -> vector<8x256xf32>
    %85 = vector.broadcast %9 : vector<1x256xf32> to vector<8x256xf32>
    %86 = arith.mulf %84, %85 : vector<8x256xf32>
    %c239_i32_37 = arith.constant 239 : i32
    %87 = tpu.dynamic_rotate %64 by %c239_i32_37 dim 1 : vector<8x256xf32>, i32 -> vector<8x256xf32>
    %88 = vector.broadcast %10 : vector<1x256xf32> to vector<8x256xf32>
    %89 = arith.mulf %87, %88 : vector<8x256xf32>
    %90 = tpu.concatenate %68, %71, %74, %77, %64, %80, %83, %86, %89 in 0 : vector<8x256xf32>, vector<8x256xf32>, vector<8x256xf32>, vector<8x256xf32>, vector<8x256xf32>, vector<8x256xf32>, vector<8x256xf32>, vector<8x256xf32>, vector<8x256xf32> -> vector<72x256xf32>
    %cst_38 = arith.constant dense<0.000000e+00> : vector<8x256xf32>
    %91 = tpu.matmul %65, %90, %cst_38 {dimension_numbers = #tpu.dot_dimension_numbers<[1], [0], [0], [1], [0, 0, 1, 1], [], []>} : vector<8x72xf32>, vector<72x256xf32>, vector<8x256xf32> -> vector<8x256xf32>
    %c0_39 = arith.constant 0 : index
    %c0_40 = arith.constant 0 : index
    %92 = vector.load %arg6[%c0_39, %c0_40] : memref<8x1xf32, #tpu.memory_space<vmem>>, vector<8x1xf32>
    %c0_41 = arith.constant 0 : index
    %c0_42 = arith.constant 0 : index
    %93 = vector.load %arg7[%c0_41, %c0_42] : memref<8x1xf32, #tpu.memory_space<vmem>>, vector<8x1xf32>
    %cst_43 = arith.constant dense<0.000000e+00> : vector<8x1xf32>
    %94 = tpu.matmul %91, %2, %cst_43 {dimension_numbers = #tpu.dot_dimension_numbers<[1], [0], [0], [1], [0, 0, 1, 1], [], []>} : vector<8x256xf32>, vector<256x1xf32>, vector<8x1xf32> -> vector<8x1xf32>
    %cst_44 = arith.constant dense<0.000000e+00> : vector<8x1xf32>
    %95 = tpu.matmul %1, %94, %cst_44 {dimension_numbers = #tpu.dot_dimension_numbers<[1], [0], [0], [1], [0, 0, 1, 1], [], []>} : vector<8x8xf32>, vector<8x1xf32>, vector<8x1xf32> -> vector<8x1xf32>
    %cst_45 = arith.constant 0.001953125 : f32
    %96 = vector.broadcast %cst_45 : f32 to vector<8x1xf32>
    %97 = arith.mulf %95, %96 : vector<8x1xf32>
    %98 = vector.broadcast %97 : vector<8x1xf32> to vector<8x256xf32>
    %99 = arith.subf %91, %98 : vector<8x256xf32>
    %100 = arith.mulf %99, %99 : vector<8x256xf32>
    %cst_46 = arith.constant dense<0.000000e+00> : vector<8x1xf32>
    %101 = tpu.matmul %100, %2, %cst_46 {dimension_numbers = #tpu.dot_dimension_numbers<[1], [0], [0], [1], [0, 0, 1, 1], [], []>} : vector<8x256xf32>, vector<256x1xf32>, vector<8x1xf32> -> vector<8x1xf32>
    %cst_47 = arith.constant dense<0.000000e+00> : vector<8x1xf32>
    %102 = tpu.matmul %1, %101, %cst_47 {dimension_numbers = #tpu.dot_dimension_numbers<[1], [0], [0], [1], [0, 0, 1, 1], [], []>} : vector<8x8xf32>, vector<8x1xf32>, vector<8x1xf32> -> vector<8x1xf32>
    %cst_48 = arith.constant 0.001953125 : f32
    %103 = vector.broadcast %cst_48 : f32 to vector<8x1xf32>
    %104 = arith.mulf %102, %103 : vector<8x1xf32>
    %cst_49 = arith.constant 9.99999974E-6 : f32
    %105 = vector.broadcast %cst_49 : f32 to vector<8x1xf32>
    %106 = arith.addf %104, %105 : vector<8x1xf32>
    %107 = math.rsqrt %106 : vector<8x1xf32>
    %108 = vector.broadcast %107 : vector<8x1xf32> to vector<8x256xf32>
    %109 = arith.mulf %99, %108 : vector<8x256xf32>
    %110 = vector.broadcast %92 : vector<8x1xf32> to vector<8x256xf32>
    %111 = arith.mulf %109, %110 : vector<8x256xf32>
    %112 = vector.broadcast %93 : vector<8x1xf32> to vector<8x256xf32>
    %113 = arith.addf %111, %112 : vector<8x256xf32>
    %cst_50 = arith.constant 0.000000e+00 : f32
    %114 = vector.broadcast %cst_50 : f32 to vector<8x256xf32>
    %115 = arith.cmpf ogt, %113, %114 : vector<8x256xf32>
    %cst_51 = arith.constant 0.00999999977 : f32
    %116 = vector.broadcast %cst_51 : f32 to vector<8x256xf32>
    %117 = arith.mulf %116, %113 : vector<8x256xf32>
    %118 = arith.select %115, %113, %117 : vector<8x256xi1>, vector<8x256xf32>
    %119 = arith.addf %0, %118 : vector<8x256xf32>
    %c0_52 = arith.constant 0 : index
    %c0_53 = arith.constant 0 : index
    %120 = vector.load %arg9[%c0_52, %c0_53] : memref<8x256xf32, #tpu.memory_space<vmem>>, vector<8x256xf32>
    tpu.vector_store %arg9[%c0_52, %c0_53], %119 {strides = array<i32>} : memref<8x256xf32, #tpu.memory_space<vmem>>, vector<8x256xf32>,
    return
  }
}

</mosaic_0001>

<llo_original>
// kernel: tpu_custom_call.1
$region0: #{tpu_custom_call.1}
  #allocation0 [shape = 'u32[]', space=smem, size = 0x4, offset = 0x4, fixed_abs, tag = 'smem constant byte address 0x4 - core index']
  #allocation1 [shape = 'u32[144,128]{1,0:T(1,128)}', space=vmem, size = 0x12000, scoped, tag = 'internal scratch']
  %s0 = inlined_call_operand.hbm [shape: f32[8,256], index: 0, kind: input, shape index: {}, may-alias: {0,9}]
  %s1 = inlined_call_operand.vmem [shape: f32[9,256], index: 1, kind: input, shape index: {}]
  %s2 = inlined_call_operand.vmem [shape: f32[8,72], index: 2, kind: input, shape index: {}]
  %s3 = inlined_call_operand.vmem [shape: f32[8,1], index: 3, kind: input, shape index: {}]
  %s4 = inlined_call_operand.vmem [shape: f32[8,1], index: 4, kind: input, shape index: {}]
  %s5 = inlined_call_operand.vmem [shape: f32[8,72], index: 5, kind: input, shape index: {}]
  %s6 = inlined_call_operand.vmem [shape: f32[8,1], index: 6, kind: input, shape index: {}]
  %s7 = inlined_call_operand.vmem [shape: f32[8,1], index: 7, kind: input, shape index: {}]
  %s8 = inlined_call_operand.vmem [shape: f32[8,8], index: 8, kind: input, shape index: {}]
  %s9 = inlined_call_operand.hbm [shape: f32[8,256], index: 9, kind: output, shape index: {}, may-alias: {0,9}]
  %s10 = sld [smem:[#allocation0]]
  $region50: #{tpu_custom_call.1} parent=0
    _
  %s12 = ssub.s32 1, %s10
  %s13 = scalar_select 0, %s12, %s10
  $region1: #{tpu_custom_call.1} parent=0
    #allocation2 [shape = 'u8[8192]{0}', space=vmem, size = 0x2000, scoped, tag = 'input window, operand 0, single buffered']
    #allocation3 [shape = 's32[1]{0}', space=sflag, size = 0x4, scoped, tag = 'scoped memory for tpu_custom_call.1']
    #allocation4 [shape = 's32[1]{0}', space=sflag, size = 0x4, scoped, tag = 'scoped memory for tpu_custom_call.1']
    #allocation5 [shape = 'u8[8192]{0}', space=vmem, size = 0x2000, scoped, tag = 'output window, operand 0, single buffered']
    %14 = vsyncpa [#allocation3], 0
    %15 = vsyncpa [#allocation4], 0
    // Predicated region
    $region2: #{tpu_custom_call.1} parent=1 // pred_check
      _
    $region3: #{tpu_custom_call.1} parent=1 // pred_check_branch
      %17 = sbr.rel (0) target = $region5
    $region4: #{tpu_custom_call.1} parent=1 // pred_region
      %s19 = ssub.s32 256, 256
      %20 = vsyncadd [#allocation3], %s19
      %s22 = sshll.u32 [#allocation2], 4
      %s23 = int_to_ptr.vmem [resolvable:$true] %s22
      %25 = dma.hbm_to_vmem [thread:$0]  %s0, 256, %s23, [#allocation3]
    $region5: #{tpu_custom_call.1} parent=1 // pred_fallthru
      _
    // Predicated region
    $region6: #{tpu_custom_call.1} parent=1 // pred_check
      _
    $region7: #{tpu_custom_call.1} parent=1 // pred_check_branch
      %27 = sbr.rel (0) target = $region9
    $region8: #{tpu_custom_call.1} parent=1 // pred_region
      _
    $region9: #{tpu_custom_call.1} parent=1 // pred_fallthru
      _
    // Predicated region
    $region10: #{tpu_custom_call.1} parent=1 // pred_check
      _
    $region11: #{tpu_custom_call.1} parent=1 // pred_check_branch
      %29 = sbr.rel (0) target = $region13
    $region12: #{tpu_custom_call.1} parent=1 // pred_region
      _
    $region13: #{tpu_custom_call.1} parent=1 // pred_fallthru
      _
    // Predicated region
    $region14: #{tpu_custom_call.1} parent=1 // pred_check
      _
    $region15: #{tpu_custom_call.1} parent=1 // pred_check_branch
      %31 = sbr.rel (0) target = $region17
    $region16: #{tpu_custom_call.1} parent=1 // pred_region
      _
    $region17: #{tpu_custom_call.1} parent=1 // pred_fallthru
      _
    // Predicated region
    $region18: #{tpu_custom_call.1} parent=1 // pred_check
      _
    $region19: #{tpu_custom_call.1} parent=1 // pred_check_branch
      %33 = sbr.rel (0) target = $region21
    $region20: #{tpu_custom_call.1} parent=1 // pred_region
      _
    $region21: #{tpu_custom_call.1} parent=1 // pred_fallthru
      _
    // Predicated region
    $region22: #{tpu_custom_call.1} parent=1 // pred_check
      _
    $region23: #{tpu_custom_call.1} parent=1 // pred_check_branch
      %35 = sbr.rel (0) target = $region25
    $region24: #{tpu_custom_call.1} parent=1 // pred_region
      _
    $region25: #{tpu_custom_call.1} parent=1 // pred_fallthru
      _
    // Predicated region
    $region26: #{tpu_custom_call.1} parent=1 // pred_check
      _
    $region27: #{tpu_custom_call.1} parent=1 // pred_check_branch
      %37 = sbr.rel (0) target = $region29
    $region28: #{tpu_custom_call.1} parent=1 // pred_region
      _
    $region29: #{tpu_custom_call.1} parent=1 // pred_fallthru
      _
    // Predicated region
    $region30: #{tpu_custom_call.1} parent=1 // pred_check
      _
    $region31: #{tpu_custom_call.1} parent=1 // pred_check_branch
      %39 = sbr.rel (0) target = $region33
    $region32: #{tpu_custom_call.1} parent=1 // pred_region
      _
    $region33: #{tpu_custom_call.1} parent=1 // pred_fallthru
      _
    // Predicated region
    $region34: #{tpu_custom_call.1} parent=1 // pred_check
      _
    $region35: #{tpu_custom_call.1} parent=1 // pred_check_branch
      %41 = sbr.rel (0) target = $region37
    $region36: #{tpu_custom_call.1} parent=1 // pred_region
      _
    $region37: #{tpu_custom_call.1} parent=1 // pred_fallthru
      _
    // Predicated region
    $region38: #{tpu_custom_call.1} parent=1 // pred_check
      _
    $region39: #{tpu_custom_call.1} parent=1 // pred_check_branch
      %43 = sbr.rel (0) target = $region41
    $region40: #{tpu_custom_call.1} parent=1 // pred_region
      %44 = dma.done [#allocation3], 256
    $region41: #{tpu_custom_call.1} parent=1 // pred_fallthru
      _
    %v45 = vld [vmem:[#allocation2] sm:$0xff]
    %v46 = vld [vmem:[#allocation2 + $0x8] sm:$0xff]
    %v47 = vld [vmem:[%s8] sm:$0xff]
    %v48 = vld [vmem:[%s1] ss:$8 sm:$0x3]
    %s49 = scalar_lea.vmem %s1, 1
    %v50 = vld [vmem:[%s49] ss:$8 sm:$0x3]
    %s51 = scalar_lea.vmem %s1, 2
    %v52 = vld [vmem:[%s51] ss:$8 sm:$0x3]
    %s53 = scalar_lea.vmem %s1, 3
    %v54 = vld [vmem:[%s53] ss:$8 sm:$0x3]
    %s55 = scalar_lea.vmem %s1, 5
    %v56 = vld [vmem:[%s55] ss:$8 sm:$0x3]
    %s57 = scalar_lea.vmem %s1, 6
    %v58 = vld [vmem:[%s57] ss:$8 sm:$0x3]
    %s59 = scalar_lea.vmem %s1, 7
    %v60 = vld [vmem:[%s59] ss:$8 sm:$0x3]
    %s61 = scalar_lea.vmem %s1, 16
    %v62 = vld [vmem:[%s61] ss:$8 sm:$0x3]
    %v63 = vld [vmem:[%s2] sm:$0xff]
    %64 = vrot.lane.b32.xlu0 %v45, 17
    %v65 = vpop.permute.xlu0 %64
    %66 = vrot.lane.b32.xlu0 %v46, 17
    %v67 = vpop.permute.xlu0 %66
    %v68 = vlaneseq
    %v69 = vand.u32 %v68, 127
    %vm70 = vcmp.lt.s32.totalorder %v69, 17
    %v71 = vsel %vm70, %v65, %v67
    %v72 = vsel %vm70, %v67, %v65
    %v74 = vlaneseq
    %v75 = vshrl.u32 %v74, 7
    %v76 = vsub.s32 0, %v75
    %v77 = vrot.slane %v48, %v76
    %v78 = vlaneseq
    %v79 = vshrl.u32 %v78, 7
    %v80 = vsub.s32 1, %v79
    %v81 = vrot.slane %v48, %v80
    %v84 = vmul.f32 %v72, %v77
    %v85 = vmul.f32 %v71, %v81
    %86 = vrot.lane.b32.xlu0 %v45, 16
    %v87 = vpop.permute.xlu0 %86
    %88 = vrot.lane.b32.xlu0 %v46, 16
    %v89 = vpop.permute.xlu0 %88
    %vm90 = vcmp.lt.s32.totalorder %v69, 16
    %v91 = vsel %vm90, %v87, %v89
    %v92 = vsel %vm90, %v89, %v87
    %v94 = vlaneseq
    %v95 = vshrl.u32 %v94, 7
    %v96 = vsub.s32 0, %v95
    %v97 = vrot.slane %v50, %v96
    %v98 = vlaneseq
    %v99 = vshrl.u32 %v98, 7
    %v100 = vsub.s32 1, %v99
    %v101 = vrot.slane %v50, %v100
    %v104 = vmul.f32 %v92, %v97
    %v105 = vmul.f32 %v91, %v101
    %106 = vrot.lane.b32.xlu0 %v45, 15
    %v107 = vpop.permute.xlu0 %106
    %108 = vrot.lane.b32.xlu0 %v46, 15
    %v109 = vpop.permute.xlu0 %108
    %vm110 = vcmp.lt.s32.totalorder %v69, 15
    %v111 = vsel %vm110, %v107, %v109
    %v112 = vsel %vm110, %v109, %v107
    %v114 = vlaneseq
    %v115 = vshrl.u32 %v114, 7
    %v116 = vsub.s32 0, %v115
    %v117 = vrot.slane %v52, %v116
    %v118 = vlaneseq
    %v119 = vshrl.u32 %v118, 7
    %v120 = vsub.s32 1, %v119
    %v121 = vrot.slane %v52, %v120
    %v124 = vmul.f32 %v112, %v117
    %v125 = vmul.f32 %v111, %v121
    %126 = vrot.lane.b32.xlu0 %v45, 1
    %v127 = vpop.permute.xlu0 %126
    %128 = vrot.lane.b32.xlu0 %v46, 1
    %v129 = vpop.permute.xlu0 %128
    %vm130 = vcmp.lt.s32.totalorder %v69, 1
    %v131 = vsel %vm130, %v127, %v129
    %v132 = vsel %vm130, %v129, %v127
    %v134 = vlaneseq
    %v135 = vshrl.u32 %v134, 7
    %v136 = vsub.s32 0, %v135
    %v137 = vrot.slane %v54, %v136
    %v138 = vlaneseq
    %v139 = vshrl.u32 %v138, 7
    %v140 = vsub.s32 1, %v139
    %v141 = vrot.slane %v54, %v140
    %v144 = vmul.f32 %v132, %v137
    %v145 = vmul.f32 %v131, %v141
    %146 = vrot.lane.b32.xlu0 %v45, 127
    %v147 = vpop.permute.xlu0 %146
    %148 = vrot.lane.b32.xlu0 %v46, 127
    %v149 = vpop.permute.xlu0 %148
    %vm150 = vcmp.lt.s32.totalorder %v69, 127
    %v151 = vsel %vm150, %v147, %v149
    %v152 = vsel %vm150, %v149, %v147
    %v154 = vlaneseq
    %v155 = vshrl.u32 %v154, 7
    %v156 = vsub.s32 0, %v155
    %v157 = vrot.slane %v56, %v156
    %v158 = vlaneseq
    %v159 = vshrl.u32 %v158, 7
    %v160 = vsub.s32 1, %v159
    %v161 = vrot.slane %v56, %v160
    %v164 = vmul.f32 %v151, %v157
    %v165 = vmul.f32 %v152, %v161
    %166 = vrot.lane.b32.xlu0 %v45, 113
    %v167 = vpop.permute.xlu0 %166
    %168 = vrot.lane.b32.xlu0 %v46, 113
    %v169 = vpop.permute.xlu0 %168
    %vm170 = vcmp.lt.s32.totalorder %v69, 113
    %v171 = vsel %vm170, %v167, %v169
    %v172 = vsel %vm170, %v169, %v167
    %v174 = vlaneseq
    %v175 = vshrl.u32 %v174, 7
    %v176 = vsub.s32 0, %v175
    %v177 = vrot.slane %v58, %v176
    %v178 = vlaneseq
    %v179 = vshrl.u32 %v178, 7
    %v180 = vsub.s32 1, %v179
    %v181 = vrot.slane %v58, %v180
    %v184 = vmul.f32 %v171, %v177
    %v185 = vmul.f32 %v172, %v181
    %186 = vrot.lane.b32.xlu0 %v45, 112
    %v187 = vpop.permute.xlu0 %186
    %188 = vrot.lane.b32.xlu0 %v46, 112
    %v189 = vpop.permute.xlu0 %188
    %vm190 = vcmp.lt.s32.totalorder %v69, 112
    %v191 = vsel %vm190, %v187, %v189
    %v192 = vsel %vm190, %v189, %v187
    %v194 = vlaneseq
    %v195 = vshrl.u32 %v194, 7
    %v196 = vsub.s32 0, %v195
    %v197 = vrot.slane %v60, %v196
    %v198 = vlaneseq
    %v199 = vshrl.u32 %v198, 7
    %v200 = vsub.s32 1, %v199
    %v201 = vrot.slane %v60, %v200
    %v204 = vmul.f32 %v191, %v197
    %v205 = vmul.f32 %v192, %v201
    %206 = vrot.lane.b32.xlu0 %v45, 111
    %v207 = vpop.permute.xlu0 %206
    %208 = vrot.lane.b32.xlu0 %v46, 111
    %v209 = vpop.permute.xlu0 %208
    %vm210 = vcmp.lt.s32.totalorder %v69, 111
    %v211 = vsel %vm210, %v207, %v209
    %v212 = vsel %vm210, %v209, %v207
    %v214 = vlaneseq
    %v215 = vshrl.u32 %v214, 7
    %v216 = vsub.s32 0, %v215
    %v217 = vrot.slane %v62, %v216
    %v218 = vlaneseq
    %v219 = vshrl.u32 %v218, 7
    %v220 = vsub.s32 1, %v219
    %v221 = vrot.slane %v62, %v220
    %v224 = vmul.f32 %v211, %v217
    %v225 = vmul.f32 %v212, %v221
    %vm226 = vcmask 588800
    %v228 = vsel %vm226, %v63, 0
    %230 = vmatprep.subr.mxu0 0.0
    %231 = vmatpush1.msra.mxu0 0.0
    %232 = vmatprep.subr.mxu0 0.0
    %233 = vmatpush1.msra.mxu0 0.0
    %234 = vmatprep.subr.mxu0 0.0
    %235 = vmatpush1.msra.mxu0 0.0
    %236 = vmatprep.subr.mxu0 0.0
    %237 = vmatpush1.msra.mxu0 0.0
    %238 = vmatprep.subr.mxu0 0.0
    %239 = vmatpush1.msra.mxu0 0.0
    %240 = vmatprep.subr.mxu0 0.0
    %241 = vmatpush1.msra.mxu0 0.0
    %242 = vmatprep.subr.mxu0 0.0
    %243 = vmatpush1.msra.mxu0 0.0
    %244 = vmatprep.subr.mxu0 %v225
    %245 = vmatpush1.msra.mxu0 %v224
    %246 = vmatprep.subr.mxu0 %v205
    %247 = vmatpush1.msra.mxu0 %v204
    %248 = vmatprep.subr.mxu0 %v185
    %249 = vmatpush1.msra.mxu0 %v184
    %250 = vmatprep.subr.mxu0 %v165
    %251 = vmatpush1.msra.mxu0 %v164
    %252 = vmatprep.subr.mxu0 %v46
    %253 = vmatpush1.msra.mxu0 %v45
    %254 = vmatprep.subr.mxu0 %v145
    %255 = vmatpush1.msra.mxu0 %v144
    %256 = vmatprep.subr.mxu0 %v125
    %257 = vmatpush1.msra.mxu0 %v124
    %258 = vmatprep.subr.mxu0 %v105
    %259 = vmatpush1.msra.mxu0 %v104
    %260 = vmatprep.subr.mxu0 %v85
    %261 = vmatpush1.msra.mxu0 %v84
    %262 = vmatprep.subr.mxu0 0.0
    %263 = vmatpush2.msra.mxu0 0.0
    %264 = vmatprep.subr.mxu0 0.0
    %265 = vmatpush2.msra.mxu0 0.0
    %266 = vmatprep.subr.mxu0 0.0
    %267 = vmatpush2.msra.mxu0 0.0
    %268 = vmatprep.subr.mxu0 0.0
    %269 = vmatpush2.msra.mxu0 0.0
    %270 = vmatprep.subr.mxu0 0.0
    %271 = vmatpush2.msra.mxu0 0.0
    %272 = vmatprep.subr.mxu0 0.0
    %273 = vmatpush2.msra.mxu0 0.0
    %274 = vmatprep.subr.mxu0 0.0
    %275 = vmatpush2.msra.mxu0 0.0
    %276 = vmatprep.subr.mxu0 0.0
    %277 = vmatpush2.msra.mxu0 0.0
    %278 = vmatprep.subr.mxu0 0.0
    %279 = vmatpush2.msra.mxu0 0.0
    %280 = vmatprep.subr.mxu0 0.0
    %281 = vmatpush2.msra.mxu0 0.0
    %282 = vmatprep.subr.mxu0 0.0
    %283 = vmatpush2.msra.mxu0 0.0
    %284 = vmatprep.subr.mxu0 0.0
    %285 = vmatpush2.msra.mxu0 0.0
    %286 = vmatprep.subr.mxu0 0.0
    %287 = vmatpush2.msra.mxu0 0.0
    %288 = vmatprep.subr.mxu0 0.0
    %289 = vmatpush2.msra.mxu0 0.0
    %290 = vmatprep.subr.mxu0 0.0
    %291 = vmatpush2.msra.mxu0 0.0
    %292 = vmatprep.subr.mxu0 0.0
    %293 = vmatpush2.msra.mxu0 0.0
    %294 = vmatprep.mubr.f32.mxu0 0.0
    %295 = vmatmul.mubr.f32.gmra.mxu0 %v228
    %v296 = vpop.f32.mrf.mxu0
    %v297 = vadd.f32 0.0, %v296
    %v298 = vpop.f32.mrf.mxu0
    %v299 = vadd.f32 0.0, %v298
    %300 = vdwg.mxu0
    %v301 = vld [vmem:[%s3] sm:$0xff]
    %v302 = vld [vmem:[%s4] sm:$0xff]
    %303 = vmatprep.subr.mxu0 0.0
    %304 = vmatpush1.msra.mxu0 1.0
    %305 = vmatprep.subr.mxu0 0.0
    %306 = vmatpush1.msra.mxu0 1.0
    %307 = vmatprep.subr.mxu0 0.0
    %308 = vmatpush1.msra.mxu0 1.0
    %309 = vmatprep.subr.mxu0 0.0
    %310 = vmatpush1.msra.mxu0 1.0
    %311 = vmatprep.subr.mxu0 0.0
    %312 = vmatpush1.msra.mxu0 1.0
    %313 = vmatprep.subr.mxu0 0.0
    %314 = vmatpush1.msra.mxu0 1.0
    %315 = vmatprep.subr.mxu0 0.0
    %316 = vmatpush1.msra.mxu0 1.0
    %317 = vmatprep.subr.mxu0 0.0
    %318 = vmatpush1.msra.mxu0 1.0
    %319 = vmatprep.subr.mxu0 0.0
    %320 = vmatpush1.msra.mxu0 1.0
    %321 = vmatprep.subr.mxu0 0.0
    %322 = vmatpush1.msra.mxu0 1.0
    %323 = vmatprep.subr.mxu0 0.0
    %324 = vmatpush1.msra.mxu0 1.0
    %325 = vmatprep.subr.mxu0 0.0
    %326 = vmatpush1.msra.mxu0 1.0
    %327 = vmatprep.subr.mxu0 0.0
    %328 = vmatpush1.msra.mxu0 1.0
    %329 = vmatprep.subr.mxu0 0.0
    %330 = vmatpush1.msra.mxu0 1.0
    %331 = vmatprep.subr.mxu0 0.0
    %332 = vmatpush1.msra.mxu0 1.0
    %333 = vmatprep.subr.mxu0 0.0
    %334 = vmatpush1.msra.mxu0 1.0
    %335 = vmatprep.subr.mxu0 0.0
    %336 = vmatpush2.msra.mxu0 1.0
    %337 = vmatprep.subr.mxu0 0.0
    %338 = vmatpush2.msra.mxu0 1.0
    %339 = vmatprep.subr.mxu0 0.0
    %340 = vmatpush2.msra.mxu0 1.0
    %341 = vmatprep.subr.mxu0 0.0
    %342 = vmatpush2.msra.mxu0 1.0
    %343 = vmatprep.subr.mxu0 0.0
    %344 = vmatpush2.msra.mxu0 1.0
    %345 = vmatprep.subr.mxu0 0.0
    %346 = vmatpush2.msra.mxu0 1.0
    %347 = vmatprep.subr.mxu0 0.0
    %348 = vmatpush2.msra.mxu0 1.0
    %349 = vmatprep.subr.mxu0 0.0
    %350 = vmatpush2.msra.mxu0 1.0
    %351 = vmatprep.subr.mxu0 0.0
    %352 = vmatpush2.msra.mxu0 1.0
    %353 = vmatprep.subr.mxu0 0.0
    %354 = vmatpush2.msra.mxu0 1.0
    %355 = vmatprep.subr.mxu0 0.0
    %356 = vmatpush2.msra.mxu0 1.0
    %357 = vmatprep.subr.mxu0 0.0
    %358 = vmatpush2.msra.mxu0 1.0
    %359 = vmatprep.subr.mxu0 0.0
    %360 = vmatpush2.msra.mxu0 1.0
    %361 = vmatprep.subr.mxu0 0.0
    %362 = vmatpush2.msra.mxu0 1.0
    %363 = vmatprep.subr.mxu0 0.0
    %364 = vmatpush2.msra.mxu0 1.0
    %365 = vmatprep.subr.mxu0 0.0
    %366 = vmatpush2.msra.mxu0 1.0
    %367 = vmatprep.mubr.f32.mxu0 %v299
    %368 = vmatmul.mubr.f32.gmra.mxu0 %v297
    %v369 = vpop.f32.mrf.mxu0
    %v370 = vadd.f32 0.0, %v369
    %v371 = vpop.f32.mrf.mxu0
    %372 = vdwg.mxu0
    %vm373 = vcmask 64512
    %v375 = vsel %vm373, %v47, 0
    %377 = vmatprep.subr.mxu0 0.0
    %378 = vmatpush1.msra.mxu0 0.0
    %379 = vmatprep.subr.mxu0 0.0
    %380 = vmatpush1.msra.mxu0 0.0
    %381 = vmatprep.subr.mxu0 0.0
    %382 = vmatpush1.msra.mxu0 0.0
    %383 = vmatprep.subr.mxu0 0.0
    %384 = vmatpush1.msra.mxu0 0.0
    %385 = vmatprep.subr.mxu0 0.0
    %386 = vmatpush1.msra.mxu0 0.0
    %387 = vmatprep.subr.mxu0 0.0
    %388 = vmatpush1.msra.mxu0 0.0
    %389 = vmatprep.subr.mxu0 0.0
    %390 = vmatpush1.msra.mxu0 0.0
    %391 = vmatprep.subr.mxu0 0.0
    %392 = vmatpush1.msra.mxu0 0.0
    %393 = vmatprep.subr.mxu0 0.0
    %394 = vmatpush1.msra.mxu0 0.0
    %395 = vmatprep.subr.mxu0 0.0
    %396 = vmatpush1.msra.mxu0 0.0
    %397 = vmatprep.subr.mxu0 0.0
    %398 = vmatpush1.msra.mxu0 0.0
    %399 = vmatprep.subr.mxu0 0.0
    %400 = vmatpush1.msra.mxu0 0.0
    %401 = vmatprep.subr.mxu0 0.0
    %402 = vmatpush1.msra.mxu0 0.0
    %403 = vmatprep.subr.mxu0 0.0
    %404 = vmatpush1.msra.mxu0 0.0
    %405 = vmatprep.subr.mxu0 0.0
    %406 = vmatpush1.msra.mxu0 0.0
    %407 = vmatprep.subr.mxu0 0.0
    %408 = vmatpush1.msra.mxu0 %v370
    %409 = vmatprep.subr.mxu0 0.0
    %410 = vmatpush2.msra.mxu0 0.0
    %411 = vmatprep.subr.mxu0 0.0
    %412 = vmatpush2.msra.mxu0 0.0
    %413 = vmatprep.subr.mxu0 0.0
    %414 = vmatpush2.msra.mxu0 0.0
    %415 = vmatprep.subr.mxu0 0.0
    %416 = vmatpush2.msra.mxu0 0.0
    %417 = vmatprep.subr.mxu0 0.0
    %418 = vmatpush2.msra.mxu0 0.0
    %419 = vmatprep.subr.mxu0 0.0
    %420 = vmatpush2.msra.mxu0 0.0
    %421 = vmatprep.subr.mxu0 0.0
    %422 = vmatpush2.msra.mxu0 0.0
    %423 = vmatprep.subr.mxu0 0.0
    %424 = vmatpush2.msra.mxu0 0.0
    %425 = vmatprep.subr.mxu0 0.0
    %426 = vmatpush2.msra.mxu0 0.0
    %427 = vmatprep.subr.mxu0 0.0
    %428 = vmatpush2.msra.mxu0 0.0
    %429 = vmatprep.subr.mxu0 0.0
    %430 = vmatpush2.msra.mxu0 0.0
    %431 = vmatprep.subr.mxu0 0.0
    %432 = vmatpush2.msra.mxu0 0.0
    %433 = vmatprep.subr.mxu0 0.0
    %434 = vmatpush2.msra.mxu0 0.0
    %435 = vmatprep.subr.mxu0 0.0
    %436 = vmatpush2.msra.mxu0 0.0
    %437 = vmatprep.subr.mxu0 0.0
    %438 = vmatpush2.msra.mxu0 0.0
    %439 = vmatprep.subr.mxu0 0.0
    %440 = vmatpush2.msra.mxu0 0.0
    %441 = vmatprep.mubr.f32.mxu0 0.0
    %442 = vmatmul.mubr.f32.gmra.mxu0 %v375
    %v443 = vpop.f32.mrf.mxu0
    %v444 = vadd.f32 0.0, %v443
    %v445 = vpop.f32.mrf.mxu0
    %446 = vdwg.mxu0
    %v447 = vmul.f32 %v444, 0.001953125
    %449 = vset.pattern.permute.xlu0 0
    %450 = vperm.xlu0 %449, %v447
    %v451 = vpop.permute.xlu0 %450
    %v453 = vsub.f32 %v297, %v451
    %v454 = vsub.f32 %v299, %v451
    %v455 = vmul.f32 %v453, %v453
    %v456 = vmul.f32 %v454, %v454
    %457 = vmatprep.subr.mxu0 0.0
    %458 = vmatpush1.msra.mxu0 1.0
    %459 = vmatprep.subr.mxu0 0.0
    %460 = vmatpush1.msra.mxu0 1.0
    %461 = vmatprep.subr.mxu0 0.0
    %462 = vmatpush1.msra.mxu0 1.0
    %463 = vmatprep.subr.mxu0 0.0
    %464 = vmatpush1.msra.mxu0 1.0
    %465 = vmatprep.subr.mxu0 0.0
    %466 = vmatpush1.msra.mxu0 1.0
    %467 = vmatprep.subr.mxu0 0.0
    %468 = vmatpush1.msra.mxu0 1.0
    %469 = vmatprep.subr.mxu0 0.0
    %470 = vmatpush1.msra.mxu0 1.0
    %471 = vmatprep.subr.mxu0 0.0
    %472 = vmatpush1.msra.mxu0 1.0
    %473 = vmatprep.subr.mxu0 0.0
    %474 = vmatpush1.msra.mxu0 1.0
    %475 = vmatprep.subr.mxu0 0.0
    %476 = vmatpush1.msra.mxu0 1.0
    %477 = vmatprep.subr.mxu0 0.0
    %478 = vmatpush1.msra.mxu0 1.0
    %479 = vmatprep.subr.mxu0 0.0
    %480 = vmatpush1.msra.mxu0 1.0
    %481 = vmatprep.subr.mxu0 0.0
    %482 = vmatpush1.msra.mxu0 1.0
    %483 = vmatprep.subr.mxu0 0.0
    %484 = vmatpush1.msra.mxu0 1.0
    %485 = vmatprep.subr.mxu0 0.0
    %486 = vmatpush1.msra.mxu0 1.0
    %487 = vmatprep.subr.mxu0 0.0
    %488 = vmatpush1.msra.mxu0 1.0
    %489 = vmatprep.subr.mxu0 0.0
    %490 = vmatpush2.msra.mxu0 1.0
    %491 = vmatprep.subr.mxu0 0.0
    %492 = vmatpush2.msra.mxu0 1.0
    %493 = vmatprep.subr.mxu0 0.0
    %494 = vmatpush2.msra.mxu0 1.0
    %495 = vmatprep.subr.mxu0 0.0
    %496 = vmatpush2.msra.mxu0 1.0
    %497 = vmatprep.subr.mxu0 0.0
    %498 = vmatpush2.msra.mxu0 1.0
    %499 = vmatprep.subr.mxu0 0.0
    %500 = vmatpush2.msra.mxu0 1.0
    %501 = vmatprep.subr.mxu0 0.0
    %502 = vmatpush2.msra.mxu0 1.0
    %503 = vmatprep.subr.mxu0 0.0
    %504 = vmatpush2.msra.mxu0 1.0
    %505 = vmatprep.subr.mxu0 0.0
    %506 = vmatpush2.msra.mxu0 1.0
    %507 = vmatprep.subr.mxu0 0.0
    %508 = vmatpush2.msra.mxu0 1.0
    %509 = vmatprep.subr.mxu0 0.0
    %510 = vmatpush2.msra.mxu0 1.0
    %511 = vmatprep.subr.mxu0 0.0
    %512 = vmatpush2.msra.mxu0 1.0
    %513 = vmatprep.subr.mxu0 0.0
    %514 = vmatpush2.msra.mxu0 1.0
    %515 = vmatprep.subr.mxu0 0.0
    %516 = vmatpush2.msra.mxu0 1.0
    %517 = vmatprep.subr.mxu0 0.0
    %518 = vmatpush2.msra.mxu0 1.0
    %519 = vmatprep.subr.mxu0 0.0
    %520 = vmatpush2.msra.mxu0 1.0
    %521 = vmatprep.mubr.f32.mxu0 %v456
    %522 = vmatmul.mubr.f32.gmra.mxu0 %v455
    %v523 = vpop.f32.mrf.mxu0
    %v524 = vadd.f32 0.0, %v523
    %v525 = vpop.f32.mrf.mxu0
    %526 = vdwg.mxu0
    %527 = vmatprep.subr.mxu0 0.0
    %528 = vmatpush1.msra.mxu0 0.0
    %529 = vmatprep.subr.mxu0 0.0
    %530 = vmatpush1.msra.mxu0 0.0
    %531 = vmatprep.subr.mxu0 0.0
    %532 = vmatpush1.msra.mxu0 0.0
    %533 = vmatprep.subr.mxu0 0.0
    %534 = vmatpush1.msra.mxu0 0.0
    %535 = vmatprep.subr.mxu0 0.0
    %536 = vmatpush1.msra.mxu0 0.0
    %537 = vmatprep.subr.mxu0 0.0
    %538 = vmatpush1.msra.mxu0 0.0
    %539 = vmatprep.subr.mxu0 0.0
    %540 = vmatpush1.msra.mxu0 0.0
    %541 = vmatprep.subr.mxu0 0.0
    %542 = vmatpush1.msra.mxu0 0.0
    %543 = vmatprep.subr.mxu0 0.0
    %544 = vmatpush1.msra.mxu0 0.0
    %545 = vmatprep.subr.mxu0 0.0
    %546 = vmatpush1.msra.mxu0 0.0
    %547 = vmatprep.subr.mxu0 0.0
    %548 = vmatpush1.msra.mxu0 0.0
    %549 = vmatprep.subr.mxu0 0.0
    %550 = vmatpush1.msra.mxu0 0.0
    %551 = vmatprep.subr.mxu0 0.0
    %552 = vmatpush1.msra.mxu0 0.0
    %553 = vmatprep.subr.mxu0 0.0
    %554 = vmatpush1.msra.mxu0 0.0
    %555 = vmatprep.subr.mxu0 0.0
    %556 = vmatpush1.msra.mxu0 0.0
    %557 = vmatprep.subr.mxu0 0.0
    %558 = vmatpush1.msra.mxu0 %v524
    %559 = vmatprep.subr.mxu0 0.0
    %560 = vmatpush2.msra.mxu0 0.0
    %561 = vmatprep.subr.mxu0 0.0
    %562 = vmatpush2.msra.mxu0 0.0
    %563 = vmatprep.subr.mxu0 0.0
    %564 = vmatpush2.msra.mxu0 0.0
    %565 = vmatprep.subr.mxu0 0.0
    %566 = vmatpush2.msra.mxu0 0.0
    %567 = vmatprep.subr.mxu0 0.0
    %568 = vmatpush2.msra.mxu0 0.0
    %569 = vmatprep.subr.mxu0 0.0
    %570 = vmatpush2.msra.mxu0 0.0
    %571 = vmatprep.subr.mxu0 0.0
    %572 = vmatpush2.msra.mxu0 0.0
    %573 = vmatprep.subr.mxu0 0.0
    %574 = vmatpush2.msra.mxu0 0.0
    %575 = vmatprep.subr.mxu0 0.0
    %576 = vmatpush2.msra.mxu0 0.0
    %577 = vmatprep.subr.mxu0 0.0
    %578 = vmatpush2.msra.mxu0 0.0
    %579 = vmatprep.subr.mxu0 0.0
    %580 = vmatpush2.msra.mxu0 0.0
    %581 = vmatprep.subr.mxu0 0.0
    %582 = vmatpush2.msra.mxu0 0.0
    %583 = vmatprep.subr.mxu0 0.0
    %584 = vmatpush2.msra.mxu0 0.0
    %585 = vmatprep.subr.mxu0 0.0
    %586 = vmatpush2.msra.mxu0 0.0
    %587 = vmatprep.subr.mxu0 0.0
    %588 = vmatpush2.msra.mxu0 0.0
    %589 = vmatprep.subr.mxu0 0.0
    %590 = vmatpush2.msra.mxu0 0.0
    %591 = vmatprep.mubr.f32.mxu0 0.0
    %592 = vmatmul.mubr.f32.gmra.mxu0 %v375
    %v593 = vpop.f32.mrf.mxu0
    %v594 = vadd.f32 0.0, %v593
    %v595 = vpop.f32.mrf.mxu0
    %596 = vdwg.mxu0
    %v597 = vmul.f32 %v594, 0.001953125
    %v598 = vadd.f32 %v597, 1e-05
    %v599 = vrsqrt.pop %v598
    %601 = vset.pattern.permute.xlu0 0
    %602 = vperm.xlu0 %601, %v599
    %v603 = vpop.permute.xlu0 %602
    %v605 = vmul.f32 %v453, %v603
    %v606 = vmul.f32 %v454, %v603
    %608 = vset.pattern.permute.xlu0 0
    %609 = vperm.xlu0 %608, %v301
    %v610 = vpop.permute.xlu0 %609
    %v612 = vmul.f32 %v605, %v610
    %v613 = vmul.f32 %v606, %v610
    %615 = vset.pattern.permute.xlu0 0
    %616 = vperm.xlu0 %615, %v302
    %v617 = vpop.permute.xlu0 %616
    %v619 = vadd.f32 %v612, %v617
    %v620 = vadd.f32 %v613, %v617
    %vm621 = vcmp.gt.f32.partialorder %v619, 0.0
    %vm622 = vcmp.gt.f32.partialorder %v620, 0.0
    %v623 = vmul.f32 %v619, 0.01
    %v624 = vmul.f32 %v620, 0.01
    %v625 = vsel %vm621, %v619, %v623
    %v626 = vsel %vm622, %v620, %v624
    %v627 = vld [vmem:[%s5] sm:$0xff]
    %628 = vrot.lane.b32.xlu0 %v625, 17
    %v629 = vpop.permute.xlu0 %628
    %630 = vrot.lane.b32.xlu0 %v626, 17
    %v631 = vpop.permute.xlu0 %630
    %v632 = vsel %vm70, %v629, %v631
    %v633 = vsel %vm70, %v631, %v629
    %v634 = vmul.f32 %v633, %v77
    %v635 = vmul.f32 %v632, %v81
    %636 = vrot.lane.b32.xlu0 %v625, 16
    %v637 = vpop.permute.xlu0 %636
    %638 = vrot.lane.b32.xlu0 %v626, 16
    %v639 = vpop.permute.xlu0 %638
    %v640 = vsel %vm90, %v637, %v639
    %v641 = vsel %vm90, %v639, %v637
    %v642 = vmul.f32 %v641, %v97
    %v643 = vmul.f32 %v640, %v101
    %644 = vrot.lane.b32.xlu0 %v625, 15
    %v645 = vpop.permute.xlu0 %644
    %646 = vrot.lane.b32.xlu0 %v626, 15
    %v647 = vpop.permute.xlu0 %646
    %v648 = vsel %vm110, %v645, %v647
    %v649 = vsel %vm110, %v647, %v645
    %v650 = vmul.f32 %v649, %v117
    %v651 = vmul.f32 %v648, %v121
    %652 = vrot.lane.b32.xlu0 %v625, 1
    %v653 = vpop.permute.xlu0 %652
    %654 = vrot.lane.b32.xlu0 %v626, 1
    %v655 = vpop.permute.xlu0 %654
    %v656 = vsel %vm130, %v653, %v655
    %v657 = vsel %vm130, %v655, %v653
    %v658 = vmul.f32 %v657, %v137
    %v659 = vmul.f32 %v656, %v141
    %660 = vrot.lane.b32.xlu0 %v625, 127
    %v661 = vpop.permute.xlu0 %660
    %662 = vrot.lane.b32.xlu0 %v626, 127
    %v663 = vpop.permute.xlu0 %662
    %v664 = vsel %vm150, %v661, %v663
    %v665 = vsel %vm150, %v663, %v661
    %v666 = vmul.f32 %v664, %v157
    %v667 = vmul.f32 %v665, %v161
    %668 = vrot.lane.b32.xlu0 %v625, 113
    %v669 = vpop.permute.xlu0 %668
    %670 = vrot.lane.b32.xlu0 %v626, 113
    %v671 = vpop.permute.xlu0 %670
    %v672 = vsel %vm170, %v669, %v671
    %v673 = vsel %vm170, %v671, %v669
    %v674 = vmul.f32 %v672, %v177
    %v675 = vmul.f32 %v673, %v181
    %676 = vrot.lane.b32.xlu0 %v625, 112
    %v677 = vpop.permute.xlu0 %676
    %678 = vrot.lane.b32.xlu0 %v626, 112
    %v679 = vpop.permute.xlu0 %678
    %v680 = vsel %vm190, %v677, %v679
    %v681 = vsel %vm190, %v679, %v677
    %v682 = vmul.f32 %v680, %v197
    %v683 = vmul.f32 %v681, %v201
    %684 = vrot.lane.b32.xlu0 %v625, 111
    %v685 = vpop.permute.xlu0 %684
    %686 = vrot.lane.b32.xlu0 %v626, 111
    %v687 = vpop.permute.xlu0 %686
    %v688 = vsel %vm210, %v685, %v687
    %v689 = vsel %vm210, %v687, %v685
    %v690 = vmul.f32 %v688, %v217
    %v691 = vmul.f32 %v689, %v221
    %v693 = vsel %vm226, %v627, 0
    %695 = vmatprep.subr.mxu0 0.0
    %696 = vmatpush1.msra.mxu0 0.0
    %697 = vmatprep.subr.mxu0 0.0
    %698 = vmatpush1.msra.mxu0 0.0
    %699 = vmatprep.subr.mxu0 0.0
    %700 = vmatpush1.msra.mxu0 0.0
    %701 = vmatprep.subr.mxu0 0.0
    %702 = vmatpush1.msra.mxu0 0.0
    %703 = vmatprep.subr.mxu0 0.0
    %704 = vmatpush1.msra.mxu0 0.0
    %705 = vmatprep.subr.mxu0 0.0
    %706 = vmatpush1.msra.mxu0 0.0
    %707 = vmatprep.subr.mxu0 0.0
    %708 = vmatpush1.msra.mxu0 0.0
    %709 = vmatprep.subr.mxu0 %v691
    %710 = vmatpush1.msra.mxu0 %v690
    %711 = vmatprep.subr.mxu0 %v683
    %712 = vmatpush1.msra.mxu0 %v682
    %713 = vmatprep.subr.mxu0 %v675
    %714 = vmatpush1.msra.mxu0 %v674
    %715 = vmatprep.subr.mxu0 %v667
    %716 = vmatpush1.msra.mxu0 %v666
    %717 = vmatprep.subr.mxu0 %v626
    %718 = vmatpush1.msra.mxu0 %v625
    %719 = vmatprep.subr.mxu0 %v659
    %720 = vmatpush1.msra.mxu0 %v658
    %721 = vmatprep.subr.mxu0 %v651
    %722 = vmatpush1.msra.mxu0 %v650
    %723 = vmatprep.subr.mxu0 %v643
    %724 = vmatpush1.msra.mxu0 %v642
    %725 = vmatprep.subr.mxu0 %v635
    %726 = vmatpush1.msra.mxu0 %v634
    %727 = vmatprep.subr.mxu0 0.0
    %728 = vmatpush2.msra.mxu0 0.0
    %729 = vmatprep.subr.mxu0 0.0
    %730 = vmatpush2.msra.mxu0 0.0
    %731 = vmatprep.subr.mxu0 0.0
    %732 = vmatpush2.msra.mxu0 0.0
    %733 = vmatprep.subr.mxu0 0.0
    %734 = vmatpush2.msra.mxu0 0.0
    %735 = vmatprep.subr.mxu0 0.0
    %736 = vmatpush2.msra.mxu0 0.0
    %737 = vmatprep.subr.mxu0 0.0
    %738 = vmatpush2.msra.mxu0 0.0
    %739 = vmatprep.subr.mxu0 0.0
    %740 = vmatpush2.msra.mxu0 0.0
    %741 = vmatprep.subr.mxu0 0.0
    %742 = vmatpush2.msra.mxu0 0.0
    %743 = vmatprep.subr.mxu0 0.0
    %744 = vmatpush2.msra.mxu0 0.0
    %745 = vmatprep.subr.mxu0 0.0
    %746 = vmatpush2.msra.mxu0 0.0
    %747 = vmatprep.subr.mxu0 0.0
    %748 = vmatpush2.msra.mxu0 0.0
    %749 = vmatprep.subr.mxu0 0.0
    %750 = vmatpush2.msra.mxu0 0.0
    %751 = vmatprep.subr.mxu0 0.0
    %752 = vmatpush2.msra.mxu0 0.0
    %753 = vmatprep.subr.mxu0 0.0
    %754 = vmatpush2.msra.mxu0 0.0
    %755 = vmatprep.subr.mxu0 0.0
    %756 = vmatpush2.msra.mxu0 0.0
    %757 = vmatprep.subr.mxu0 0.0
    %758 = vmatpush2.msra.mxu0 0.0
    %759 = vmatprep.mubr.f32.mxu0 0.0
    %760 = vmatmul.mubr.f32.gmra.mxu0 %v693
    %v761 = vpop.f32.mrf.mxu0
    %v762 = vadd.f32 0.0, %v761
    %v763 = vpop.f32.mrf.mxu0
    %v764 = vadd.f32 0.0, %v763
    %765 = vdwg.mxu0
    %v766 = vld [vmem:[%s6] sm:$0xff]
    %v767 = vld [vmem:[%s7] sm:$0xff]
    %768 = vmatprep.subr.mxu0 0.0
    %769 = vmatpush1.msra.mxu0 1.0
    %770 = vmatprep.subr.mxu0 0.0
    %771 = vmatpush1.msra.mxu0 1.0
    %772 = vmatprep.subr.mxu0 0.0
    %773 = vmatpush1.msra.mxu0 1.0
    %774 = vmatprep.subr.mxu0 0.0
    %775 = vmatpush1.msra.mxu0 1.0
    %776 = vmatprep.subr.mxu0 0.0
    %777 = vmatpush1.msra.mxu0 1.0
    %778 = vmatprep.subr.mxu0 0.0
    %779 = vmatpush1.msra.mxu0 1.0
    %780 = vmatprep.subr.mxu0 0.0
    %781 = vmatpush1.msra.mxu0 1.0
    %782 = vmatprep.subr.mxu0 0.0
    %783 = vmatpush1.msra.mxu0 1.0
    %784 = vmatprep.subr.mxu0 0.0
    %785 = vmatpush1.msra.mxu0 1.0
    %786 = vmatprep.subr.mxu0 0.0
    %787 = vmatpush1.msra.mxu0 1.0
    %788 = vmatprep.subr.mxu0 0.0
    %789 = vmatpush1.msra.mxu0 1.0
    %790 = vmatprep.subr.mxu0 0.0
    %791 = vmatpush1.msra.mxu0 1.0
    %792 = vmatprep.subr.mxu0 0.0
    %793 = vmatpush1.msra.mxu0 1.0
    %794 = vmatprep.subr.mxu0 0.0
    %795 = vmatpush1.msra.mxu0 1.0
    %796 = vmatprep.subr.mxu0 0.0
    %797 = vmatpush1.msra.mxu0 1.0
    %798 = vmatprep.subr.mxu0 0.0
    %799 = vmatpush1.msra.mxu0 1.0
    %800 = vmatprep.subr.mxu0 0.0
    %801 = vmatpush2.msra.mxu0 1.0
    %802 = vmatprep.subr.mxu0 0.0
    %803 = vmatpush2.msra.mxu0 1.0
    %804 = vmatprep.subr.mxu0 0.0
    %805 = vmatpush2.msra.mxu0 1.0
    %806 = vmatprep.subr.mxu0 0.0
    %807 = vmatpush2.msra.mxu0 1.0
    %808 = vmatprep.subr.mxu0 0.0
    %809 = vmatpush2.msra.mxu0 1.0
    %810 = vmatprep.subr.mxu0 0.0
    %811 = vmatpush2.msra.mxu0 1.0
    %812 = vmatprep.subr.mxu0 0.0
    %813 = vmatpush2.msra.mxu0 1.0
    %814 = vmatprep.subr.mxu0 0.0
    %815 = vmatpush2.msra.mxu0 1.0
    %816 = vmatprep.subr.mxu0 0.0
    %817 = vmatpush2.msra.mxu0 1.0
    %818 = vmatprep.subr.mxu0 0.0
    %819 = vmatpush2.msra.mxu0 1.0
    %820 = vmatprep.subr.mxu0 0.0
    %821 = vmatpush2.msra.mxu0 1.0
    %822 = vmatprep.subr.mxu0 0.0
    %823 = vmatpush2.msra.mxu0 1.0
    %824 = vmatprep.subr.mxu0 0.0
    %825 = vmatpush2.msra.mxu0 1.0
    %826 = vmatprep.subr.mxu0 0.0
    %827 = vmatpush2.msra.mxu0 1.0
    %828 = vmatprep.subr.mxu0 0.0
    %829 = vmatpush2.msra.mxu0 1.0
    %830 = vmatprep.subr.mxu0 0.0
    %831 = vmatpush2.msra.mxu0 1.0
    %832 = vmatprep.mubr.f32.mxu0 %v764
    %833 = vmatmul.mubr.f32.gmra.mxu0 %v762
    %v834 = vpop.f32.mrf.mxu0
    %v835 = vadd.f32 0.0, %v834
    %v836 = vpop.f32.mrf.mxu0
    %837 = vdwg.mxu0
    %838 = vmatprep.subr.mxu0 0.0
    %839 = vmatpush1.msra.mxu0 0.0
    %840 = vmatprep.subr.mxu0 0.0
    %841 = vmatpush1.msra.mxu0 0.0
    %842 = vmatprep.subr.mxu0 0.0
    %843 = vmatpush1.msra.mxu0 0.0
    %844 = vmatprep.subr.mxu0 0.0
    %845 = vmatpush1.msra.mxu0 0.0
    %846 = vmatprep.subr.mxu0 0.0
    %847 = vmatpush1.msra.mxu0 0.0
    %848 = vmatprep.subr.mxu0 0.0
    %849 = vmatpush1.msra.mxu0 0.0
    %850 = vmatprep.subr.mxu0 0.0
    %851 = vmatpush1.msra.mxu0 0.0
    %852 = vmatprep.subr.mxu0 0.0
    %853 = vmatpush1.msra.mxu0 0.0
    %854 = vmatprep.subr.mxu0 0.0
    %855 = vmatpush1.msra.mxu0 0.0
    %856 = vmatprep.subr.mxu0 0.0
    %857 = vmatpush1.msra.mxu0 0.0
    %858 = vmatprep.subr.mxu0 0.0
    %859 = vmatpush1.msra.mxu0 0.0
    %860 = vmatprep.subr.mxu0 0.0
    %861 = vmatpush1.msra.mxu0 0.0
    %862 = vmatprep.subr.mxu0 0.0
    %863 = vmatpush1.msra.mxu0 0.0
    %864 = vmatprep.subr.mxu0 0.0
    %865 = vmatpush1.msra.mxu0 0.0
    %866 = vmatprep.subr.mxu0 0.0
    %867 = vmatpush1.msra.mxu0 0.0
    %868 = vmatprep.subr.mxu0 0.0
    %869 = vmatpush1.msra.mxu0 %v835
    %870 = vmatprep.subr.mxu0 0.0
    %871 = vmatpush2.msra.mxu0 0.0
    %872 = vmatprep.subr.mxu0 0.0
    %873 = vmatpush2.msra.mxu0 0.0
    %874 = vmatprep.subr.mxu0 0.0
    %875 = vmatpush2.msra.mxu0 0.0
    %876 = vmatprep.subr.mxu0 0.0
    %877 = vmatpush2.msra.mxu0 0.0
    %878 = vmatprep.subr.mxu0 0.0
    %879 = vmatpush2.msra.mxu0 0.0
    %880 = vmatprep.subr.mxu0 0.0
    %881 = vmatpush2.msra.mxu0 0.0
    %882 = vmatprep.subr.mxu0 0.0
    %883 = vmatpush2.msra.mxu0 0.0
    %884 = vmatprep.subr.mxu0 0.0
    %885 = vmatpush2.msra.mxu0 0.0
    %886 = vmatprep.subr.mxu0 0.0
    %887 = vmatpush2.msra.mxu0 0.0
    %888 = vmatprep.subr.mxu0 0.0
    %889 = vmatpush2.msra.mxu0 0.0
    %890 = vmatprep.subr.mxu0 0.0
    %891 = vmatpush2.msra.mxu0 0.0
    %892 = vmatprep.subr.mxu0 0.0
    %893 = vmatpush2.msra.mxu0 0.0
    %894 = vmatprep.subr.mxu0 0.0
    %895 = vmatpush2.msra.mxu0 0.0
    %896 = vmatprep.subr.mxu0 0.0
    %897 = vmatpush2.msra.mxu0 0.0
    %898 = vmatprep.subr.mxu0 0.0
    %899 = vmatpush2.msra.mxu0 0.0
    %900 = vmatprep.subr.mxu0 0.0
    %901 = vmatpush2.msra.mxu0 0.0
    %902 = vmatprep.mubr.f32.mxu0 0.0
    %903 = vmatmul.mubr.f32.gmra.mxu0 %v375
    %v904 = vpop.f32.mrf.mxu0
    %v905 = vadd.f32 0.0, %v904
    %v906 = vpop.f32.mrf.mxu0
    %907 = vdwg.mxu0
    %v908 = vmul.f32 %v905, 0.001953125
    %910 = vset.pattern.permute.xlu0 0
    %911 = vperm.xlu0 %910, %v908
    %v912 = vpop.permute.xlu0 %911
    %v914 = vsub.f32 %v762, %v912
    %v915 = vsub.f32 %v764, %v912
    %v916 = vmul.f32 %v914, %v914
    %v917 = vmul.f32 %v915, %v915
    %918 = vmatprep.subr.mxu0 0.0
    %919 = vmatpush1.msra.mxu0 1.0
    %920 = vmatprep.subr.mxu0 0.0
    %921 = vmatpush1.msra.mxu0 1.0
    %922 = vmatprep.subr.mxu0 0.0
    %923 = vmatpush1.msra.mxu0 1.0
    %924 = vmatprep.subr.mxu0 0.0
    %925 = vmatpush1.msra.mxu0 1.0
    %926 = vmatprep.subr.mxu0 0.0
    %927 = vmatpush1.msra.mxu0 1.0
    %928 = vmatprep.subr.mxu0 0.0
    %929 = vmatpush1.msra.mxu0 1.0
    %930 = vmatprep.subr.mxu0 0.0
    %931 = vmatpush1.msra.mxu0 1.0
    %932 = vmatprep.subr.mxu0 0.0
    %933 = vmatpush1.msra.mxu0 1.0
    %934 = vmatprep.subr.mxu0 0.0
    %935 = vmatpush1.msra.mxu0 1.0
    %936 = vmatprep.subr.mxu0 0.0
    %937 = vmatpush1.msra.mxu0 1.0
    %938 = vmatprep.subr.mxu0 0.0
    %939 = vmatpush1.msra.mxu0 1.0
    %940 = vmatprep.subr.mxu0 0.0
    %941 = vmatpush1.msra.mxu0 1.0
    %942 = vmatprep.subr.mxu0 0.0
    %943 = vmatpush1.msra.mxu0 1.0
    %944 = vmatprep.subr.mxu0 0.0
    %945 = vmatpush1.msra.mxu0 1.0
    %946 = vmatprep.subr.mxu0 0.0
    %947 = vmatpush1.msra.mxu0 1.0
    %948 = vmatprep.subr.mxu0 0.0
    %949 = vmatpush1.msra.mxu0 1.0
    %950 = vmatprep.subr.mxu0 0.0
    %951 = vmatpush2.msra.mxu0 1.0
    %952 = vmatprep.subr.mxu0 0.0
    %953 = vmatpush2.msra.mxu0 1.0
    %954 = vmatprep.subr.mxu0 0.0
    %955 = vmatpush2.msra.mxu0 1.0
    %956 = vmatprep.subr.mxu0 0.0
    %957 = vmatpush2.msra.mxu0 1.0
    %958 = vmatprep.subr.mxu0 0.0
    %959 = vmatpush2.msra.mxu0 1.0
    %960 = vmatprep.subr.mxu0 0.0
    %961 = vmatpush2.msra.mxu0 1.0
    %962 = vmatprep.subr.mxu0 0.0
    %963 = vmatpush2.msra.mxu0 1.0
    %964 = vmatprep.subr.mxu0 0.0
    %965 = vmatpush2.msra.mxu0 1.0
    %966 = vmatprep.subr.mxu0 0.0
    %967 = vmatpush2.msra.mxu0 1.0
    %968 = vmatprep.subr.mxu0 0.0
    %969 = vmatpush2.msra.mxu0 1.0
    %970 = vmatprep.subr.mxu0 0.0
    %971 = vmatpush2.msra.mxu0 1.0
    %972 = vmatprep.subr.mxu0 0.0
    %973 = vmatpush2.msra.mxu0 1.0
    %974 = vmatprep.subr.mxu0 0.0
    %975 = vmatpush2.msra.mxu0 1.0
    %976 = vmatprep.subr.mxu0 0.0
    %977 = vmatpush2.msra.mxu0 1.0
    %978 = vmatprep.subr.mxu0 0.0
    %979 = vmatpush2.msra.mxu0 1.0
    %980 = vmatprep.subr.mxu0 0.0
    %981 = vmatpush2.msra.mxu0 1.0
    %982 = vmatprep.mubr.f32.mxu0 %v917
    %983 = vmatmul.mubr.f32.gmra.mxu0 %v916
    %v984 = vpop.f32.mrf.mxu0
    %v985 = vadd.f32 0.0, %v984
    %v986 = vpop.f32.mrf.mxu0
    %987 = vdwg.mxu0
    %988 = vmatprep.subr.mxu0 0.0
    %989 = vmatpush1.msra.mxu0 0.0
    %990 = vmatprep.subr.mxu0 0.0
    %991 = vmatpush1.msra.mxu0 0.0
    %992 = vmatprep.subr.mxu0 0.0
    %993 = vmatpush1.msra.mxu0 0.0
    %994 = vmatprep.subr.mxu0 0.0
    %995 = vmatpush1.msra.mxu0 0.0
    %996 = vmatprep.subr.mxu0 0.0
    %997 = vmatpush1.msra.mxu0 0.0
    %998 = vmatprep.subr.mxu0 0.0
    %999 = vmatpush1.msra.mxu0 0.0
    %1000 = vmatprep.subr.mxu0 0.0
    %1001 = vmatpush1.msra.mxu0 0.0
    %1002 = vmatprep.subr.mxu0 0.0
    %1003 = vmatpush1.msra.mxu0 0.0
    %1004 = vmatprep.subr.mxu0 0.0
    %1005 = vmatpush1.msra.mxu0 0.0
    %1006 = vmatprep.subr.mxu0 0.0
    %1007 = vmatpush1.msra.mxu0 0.0
    %1008 = vmatprep.subr.mxu0 0.0
    %1009 = vmatpush1.msra.mxu0 0.0
    %1010 = vmatprep.subr.mxu0 0.0
    %1011 = vmatpush1.msra.mxu0 0.0
    %1012 = vmatprep.subr.mxu0 0.0
    %1013 = vmatpush1.msra.mxu0 0.0
    %1014 = vmatprep.subr.mxu0 0.0
    %1015 = vmatpush1.msra.mxu0 0.0
    %1016 = vmatprep.subr.mxu0 0.0
    %1017 = vmatpush1.msra.mxu0 0.0
    %1018 = vmatprep.subr.mxu0 0.0
    %1019 = vmatpush1.msra.mxu0 %v985
    %1020 = vmatprep.subr.mxu0 0.0
    %1021 = vmatpush2.msra.mxu0 0.0
    %1022 = vmatprep.subr.mxu0 0.0
    %1023 = vmatpush2.msra.mxu0 0.0
    %1024 = vmatprep.subr.mxu0 0.0
    %1025 = vmatpush2.msra.mxu0 0.0
    %1026 = vmatprep.subr.mxu0 0.0
    %1027 = vmatpush2.msra.mxu0 0.0
    %1028 = vmatprep.subr.mxu0 0.0
    %1029 = vmatpush2.msra.mxu0 0.0
    %1030 = vmatprep.subr.mxu0 0.0
    %1031 = vmatpush2.msra.mxu0 0.0
    %1032 = vmatprep.subr.mxu0 0.0
    %1033 = vmatpush2.msra.mxu0 0.0
    %1034 = vmatprep.subr.mxu0 0.0
    %1035 = vmatpush2.msra.mxu0 0.0
    %1036 = vmatprep.subr.mxu0 0.0
    %1037 = vmatpush2.msra.mxu0 0.0
    %1038 = vmatprep.subr.mxu0 0.0
    %1039 = vmatpush2.msra.mxu0 0.0
    %1040 = vmatprep.subr.mxu0 0.0
    %1041 = vmatpush2.msra.mxu0 0.0
    %1042 = vmatprep.subr.mxu0 0.0
    %1043 = vmatpush2.msra.mxu0 0.0
    %1044 = vmatprep.subr.mxu0 0.0
    %1045 = vmatpush2.msra.mxu0 0.0
    %1046 = vmatprep.subr.mxu0 0.0
    %1047 = vmatpush2.msra.mxu0 0.0
    %1048 = vmatprep.subr.mxu0 0.0
    %1049 = vmatpush2.msra.mxu0 0.0
    %1050 = vmatprep.subr.mxu0 0.0
    %1051 = vmatpush2.msra.mxu0 0.0
    %1052 = vmatprep.mubr.f32.mxu0 0.0
    %1053 = vmatmul.mubr.f32.gmra.mxu0 %v375
    %v1054 = vpop.f32.mrf.mxu0
    %v1055 = vadd.f32 0.0, %v1054
    %v1056 = vpop.f32.mrf.mxu0
    %1057 = vdwg.mxu0
    %v1058 = vmul.f32 %v1055, 0.001953125
    %v1059 = vadd.f32 %v1058, 1e-05
    %v1060 = vrsqrt.pop %v1059
    %1062 = vset.pattern.permute.xlu0 0
    %1063 = vperm.xlu0 %1062, %v1060
    %v1064 = vpop.permute.xlu0 %1063
    %v1066 = vmul.f32 %v914, %v1064
    %v1067 = vmul.f32 %v915, %v1064
    %1069 = vset.pattern.permute.xlu0 0
    %1070 = vperm.xlu0 %1069, %v766
    %v1071 = vpop.permute.xlu0 %1070
    %v1073 = vmul.f32 %v1066, %v1071
    %v1074 = vmul.f32 %v1067, %v1071
    %1076 = vset.pattern.permute.xlu0 0
    %1077 = vperm.xlu0 %1076, %v767
    %v1078 = vpop.permute.xlu0 %1077
    %v1080 = vadd.f32 %v1073, %v1078
    %v1081 = vadd.f32 %v1074, %v1078
    %vm1082 = vcmp.gt.f32.partialorder %v1080, 0.0
    %vm1083 = vcmp.gt.f32.partialorder %v1081, 0.0
    %v1084 = vmul.f32 %v1080, 0.01
    %v1085 = vmul.f32 %v1081, 0.01
    %v1086 = vsel %vm1082, %v1080, %v1084
    %v1087 = vsel %vm1083, %v1081, %v1085
    %v1088 = vadd.f32 %v45, %v1086
    %v1089 = vadd.f32 %v46, %v1087
    %1090 = vst [vmem:[#allocation5] sm:$0xff] %v1088
    %1091 = vst [vmem:[#allocation5 + $0x8] sm:$0xff] %v1089
    // Predicated region
    $region42: #{tpu_custom_call.1} parent=1 // pred_check
      _
    $region43: #{tpu_custom_call.1} parent=1 // pred_check_branch
      %1093 = sbr.rel (0) target = $region45
    $region44: #{tpu_custom_call.1} parent=1 // pred_region
      %s1095 = ssub.s32 256, 256
      %1096 = vsyncadd [#allocation4], %s1095
      %s1098 = sshll.u32 [#allocation5], 4
      %s1099 = int_to_ptr.vmem [resolvable:$true] %s1098
      %1101 = dma.vmem_to_hbm [thread:$0]  %s1099, 256, %s9, [#allocation4]
    $region45: #{tpu_custom_call.1} parent=1 // pred_fallthru
      _
    // Predicated region
    $region46: #{tpu_custom_call.1} parent=1 // pred_check
      _
    $region47: #{tpu_custom_call.1} parent=1 // pred_check_branch
      %1103 = sbr.rel (0) target = $region49
    $region48: #{tpu_custom_call.1} parent=1 // pred_region
      %1104 = dma.done [#allocation4], 256
    $region49: #{tpu_custom_call.1} parent=1 // pred_fallthru
      _
    %1105 = vsyncpa [#allocation3], 1
    %1106 = vsyncpa [#allocation4], 1

</llo_original>
